<compile_context>
chip_gen: v7x
topology: tpu7x:2x2x1
jax: 0.10.0
libtpu: 0.0.40
codegen_flags: <defaults>
</compile_context>

<pallas_src>
import functools
import math

import jax
import jax.numpy as jnp
from jax.experimental import pallas as pl
from jax.experimental.pallas import tpu as pltpu

D_MODEL = 16
VOCAB_SIZE = 50


def _round_up(x: int, m: int) -> int:
    return ((x + m - 1) // m) * m


def _vmem_capacity_bytes() -> int:
    try:
        return int(pltpu.get_tpu_info().vmem_capacity_bytes)
    except Exception:
        return 64 * 1024 * 1024  # conservative fallback (v7x per-TC VMEM)


# ----------------------------------------------------------------------------
# Fast path: table resident in VMEM, in-VMEM dynamic-slice gather (no DMAs).
# ----------------------------------------------------------------------------
def _embed_vmem_kernel(ids_ref, table_ref, out_ref):
    # ids_ref:   (N_pad,) int32 flattened token ids, SMEM (scalar prefetch)
    # table_ref: (V, D)   embedding table, full-array block resident in VMEM
    # out_ref:   (tile_n, D) output block for this token tile
    V, D = table_ref.shape
    tile_n = out_ref.shape[0]
    base = pl.program_id(0) * tile_n
    scale = jnp.float32(math.sqrt(D))  # keep the multiply in f32 (v5e-safe)
    for t in range(tile_n):  # tile_n is a small static int -> straight-line code
        row = jnp.clip(ids_ref[base + t], 0, V - 1)  # clamp OOB ids (jnp semantics)
        out_ref[pl.ds(t, 1), :] = (
            table_ref[pl.ds(row, 1), :] * scale
        ).astype(out_ref.dtype)


# ----------------------------------------------------------------------------
# Slow path: table left in HBM, per-row DMA gather double-buffered across
# grid steps (prefetch tile i+1 before waiting on tile i).
# ----------------------------------------------------------------------------
def _embed_hbm_kernel(ids_ref, table_ref, out_ref, rows_ref, sem_ref, *, num_tiles):
    # ids_ref:   (N_pad,)          int32 flattened ids, SMEM (scalar prefetch)
    # table_ref: (V, D)            embedding table, left in HBM (pl.ANY)
    # out_ref:   (tile_n, D)       output block (VMEM)
    # rows_ref:  (2, tile_n, D)    VMEM double buffer for gathered rows
    # sem_ref:   (2,)              one shared DMA semaphore per buffer slot
    V, D = table_ref.shape
    tile_n = out_ref.shape[0]
    i = pl.program_id(0)
    slot = i & 1
    scale = jnp.float32(math.sqrt(D))

    def issue(tile_idx, s):
        base = tile_idx * tile_n
        for t in range(tile_n):
            row = jnp.clip(ids_ref[base + t], 0, V - 1)
            pltpu.make_async_copy(
                table_ref.at[pl.ds(row, 1), :],          # (1, D) row from HBM
                rows_ref.at[s].at[pl.ds(t, 1), :],       # (1, D) slot in VMEM
                sem_ref.at[s],                           # shared per-slot sem
            ).start()

    # Prime the pipeline: fetch tile 0 into slot 0 on the first grid step only.
    @pl.when(i == 0)
    def _():
        issue(0, 0)

    # Cross-step prefetch: start next tile's gathers BEFORE waiting on ours.
    @pl.when(i + 1 < num_tiles)
    def _():
        issue(i + 1, (i + 1) & 1)

    # Wait for the current tile's rows.  wait() only needs the destination
    # shape + semaphore, so the descriptors are reconstructed here.
    for t in range(tile_n):
        pltpu.make_async_copy(
            table_ref.at[pl.ds(0, 1), :],
            rows_ref.at[slot].at[pl.ds(t, 1), :],
            sem_ref.at[slot],
        ).wait()

    # Fused sqrt(d_model) scaling + single store of the whole tile.
    out_ref[...] = (rows_ref[slot] * scale).astype(out_ref.dtype)


# ----------------------------------------------------------------------------
# Wrapper
# ----------------------------------------------------------------------------
def input_embeddings(x_ids, table, *, tile_tokens=None, force_hbm_gather=False):
    """x_ids: (B, S) int token ids; table: (V, D). Returns (B, S, D) scaled embeddings."""
    B, S = x_ids.shape
    V, D = table.shape
    N = B * S
    itemsize = jnp.dtype(table.dtype).itemsize

    # --- token-tile selection: prefer a multiple-of-8 tile that divides N ---
    if tile_tokens is None:
        tile_tokens = min(256, _round_up(N, 8))
        tile_tokens = _round_up(tile_tokens, 8)
        for t in range(tile_tokens, 7, -8):
            if N % t == 0:
                tile_tokens = t
                break
    tile_tokens = _round_up(tile_tokens, 8)
    n_pad = _round_up(N, tile_tokens)
    num_tiles = n_pad // tile_tokens

    ids = x_ids.reshape(N).astype(jnp.int32)
    if n_pad != N:
        ids = jnp.pad(ids, (0, n_pad - N))  # padded ids gather row 0, sliced off below
    # TODO(synk): for very large B*S, chunk the call at the wrapper level — the
    # flattened id vector lives in SMEM, which pads 1-D arrays to next_pow2(4N) bytes.

    table_bytes = V * D * itemsize
    vmem_cap = _vmem_capacity_bytes()
    use_vmem_table = (not force_hbm_gather) and (table_bytes <= vmem_cap // 4)

    out_shape = jax.ShapeDtypeStruct((n_pad, D), table.dtype)
    # NOTE: for production D (multiple of 128) this output block is lane-dense;
    # at toy D=16 the masked stores are noise.
    out_spec = pl.BlockSpec((tile_tokens, D), lambda i, ids_ref: (i, 0))

    if use_vmem_table:
        # Fast path: whole table resident in VMEM (constant-index block reused
        # across every grid step), rows gathered with in-VMEM dynamic slices.
        vmem_need = table_bytes + 4 * tile_tokens * D * itemsize + (1 << 20)
        cp_kwargs = {}
        if vmem_need > 16 * 1024 * 1024:  # only raise past the smallest scoped default
            cp_kwargs["vmem_limit_bytes"] = min(vmem_need + (8 << 20), vmem_cap)
        grid_spec = pltpu.PrefetchScalarGridSpec(
            num_scalar_prefetch=1,                            # ids -> SMEM
            grid=(num_tiles,),
            in_specs=[pl.BlockSpec((V, D), lambda i, ids_ref: (0, 0))],
            out_specs=out_spec,
        )
        params = pltpu.CompilerParams(
            dimension_semantics=("parallel",), **cp_kwargs)   # steps independent
        kernel = _embed_vmem_kernel
    else:
        # Slow path: HBM table + per-row DMA gather, double-buffered across steps.
        grid_spec = pltpu.PrefetchScalarGridSpec(
            num_scalar_prefetch=1,
            grid=(num_tiles,),
            in_specs=[pl.BlockSpec(memory_space=pl.ANY)],     # table stays in HBM
            out_specs=out_spec,
            scratch_shapes=[
                pltpu.VMEM((2, tile_tokens, D), table.dtype),
                pltpu.SemaphoreType.DMA((2,)),
            ],
        )
        # Cross-step prefetch => grid steps are order-dependent.
        params = pltpu.CompilerParams(dimension_semantics=("arbitrary",))
        kernel = functools.partial(_embed_hbm_kernel, num_tiles=num_tiles)

    out_flat = pl.pallas_call(
        kernel,
        out_shape=out_shape,
        grid_spec=grid_spec,
        compiler_params=params,
    )(ids, table)

    if n_pad != N:
        out_flat = out_flat[:N]
    return out_flat.reshape(B, S, D)  # contiguous reshape, no copy


def _reference(x_ids, table):
    return table[x_ids] * jnp.float32(math.sqrt(table.shape[1]))


if __name__ == "__main__":
    key = jax.random.PRNGKey(0)
    k_tab, k_ids = jax.random.split(key)

    # Deterministic "nn.Embedding" weights: N(0, 1), shape (vocab_size, d_model).
    table = jax.random.normal(k_tab, (VOCAB_SIZE, D_MODEL), dtype=jnp.float32)

    # Small token-id batch: batch=2, seq=8.
    B, S = 2, 8
    x_ids = jax.random.randint(k_ids, (B, S), 0, VOCAB_SIZE, dtype=jnp.int32)

    ref = _reference(x_ids, table)

    # 1) Default call: small table -> VMEM-resident fast path, single grid step.
    out = jax.block_until_ready(input_embeddings(x_ids, table))
    assert out.shape == (B, S, D_MODEL)
    assert out.dtype == jnp.float32
    assert jnp.allclose(out, ref, atol=1e-5, rtol=1e-5)

    # 2) Forced HBM DMA-gather path with 2 tiles to exercise the cross-step
    #    double-buffered prefetch.
    out_hbm = jax.block_until_ready(
        input_embeddings(x_ids, table, tile_tokens=8, force_hbm_gather=True))
    assert out_hbm.shape == (B, S, D_MODEL)
    assert jnp.allclose(out_hbm, ref, atol=1e-5, rtol=1e-5)

    print("KERNEL_OK")
</pallas_src>

<mosaic_0001>
module attributes {stable_mosaic.version = 11 : i64} {
  func.func @_embed_vmem_kernel(%arg0: i32, %arg1: memref<16xi32, #tpu.memory_space<smem>>, %arg2: memref<50x16xf32, #tpu.memory_space<vmem>>, %arg3: memref<16x16xf32, #tpu.memory_space<vmem>>) attributes {dimension_semantics = [#tpu.dimension_semantics<parallel>], iteration_bounds = array<i64: 1>, scalar_prefetch = 1 : i64, scratch_operands = 0 : i64, tpu.core_type = #tpu.core_type<tc>, window_params = [{pipeline_mode = #tpu.pipeline_mode<synchronous>, transform_indices = @transform_0, window_bounds = array<i64: 50, 16>}, {transform_indices = @transform_1, window_bounds = array<i64: 16, 16>}]} {
    %c16_i32 = arith.constant 16 : i32
    %0 = arith.muli %arg0, %c16_i32 : i32
    %c0_i32 = arith.constant 0 : i32
    %1 = arith.addi %0, %c0_i32 : i32
    %2 = arith.index_cast %1 : i32 to index
    %3 = memref.load %arg1[%2] : memref<16xi32, #tpu.memory_space<smem>>
    %c0_i32_0 = arith.constant 0 : i32
    %c49_i32 = arith.constant 49 : i32
    %4 = arith.maxsi %c0_i32_0, %3 : i32
    %5 = arith.minsi %c49_i32, %4 : i32
    %6 = arith.index_cast %5 : i32 to index
    %c0 = arith.constant 0 : index
    %7 = vector.load %arg2[%6, %c0] : memref<50x16xf32, #tpu.memory_space<vmem>>, vector<1x16xf32>
    %cst = arith.constant 4.000000e+00 : f32
    %8 = vector.broadcast %cst : f32 to vector<1x16xf32>
    %9 = arith.mulf %7, %8 : vector<1x16xf32>
    %c0_1 = arith.constant 0 : index
    %c0_2 = arith.constant 0 : index
    %10 = vector.load %arg3[%c0_1, %c0_2] : memref<16x16xf32, #tpu.memory_space<vmem>>, vector<1x16xf32>
    tpu.vector_store %arg3[%c0_1, %c0_2], %9 {strides = array<i32>} : memref<16x16xf32, #tpu.memory_space<vmem>>, vector<1x16xf32>,
    %c1_i32 = arith.constant 1 : i32
    %11 = arith.addi %0, %c1_i32 : i32
    %12 = arith.index_cast %11 : i32 to index
    %13 = memref.load %arg1[%12] : memref<16xi32, #tpu.memory_space<smem>>
    %c0_i32_3 = arith.constant 0 : i32
    %c49_i32_4 = arith.constant 49 : i32
    %14 = arith.maxsi %c0_i32_3, %13 : i32
    %15 = arith.minsi %c49_i32_4, %14 : i32
    %16 = arith.index_cast %15 : i32 to index
    %c0_5 = arith.constant 0 : index
    %17 = vector.load %arg2[%16, %c0_5] : memref<50x16xf32, #tpu.memory_space<vmem>>, vector<1x16xf32>
    %cst_6 = arith.constant 4.000000e+00 : f32
    %18 = vector.broadcast %cst_6 : f32 to vector<1x16xf32>
    %19 = arith.mulf %17, %18 : vector<1x16xf32>
    %c1 = arith.constant 1 : index
    %c0_7 = arith.constant 0 : index
    %20 = vector.load %arg3[%c1, %c0_7] : memref<16x16xf32, #tpu.memory_space<vmem>>, vector<1x16xf32>
    tpu.vector_store %arg3[%c1, %c0_7], %19 {strides = array<i32>} : memref<16x16xf32, #tpu.memory_space<vmem>>, vector<1x16xf32>,
    %c2_i32 = arith.constant 2 : i32
    %21 = arith.addi %0, %c2_i32 : i32
    %22 = arith.index_cast %21 : i32 to index
    %23 = memref.load %arg1[%22] : memref<16xi32, #tpu.memory_space<smem>>
    %c0_i32_8 = arith.constant 0 : i32
    %c49_i32_9 = arith.constant 49 : i32
    %24 = arith.maxsi %c0_i32_8, %23 : i32
    %25 = arith.minsi %c49_i32_9, %24 : i32
    %26 = arith.index_cast %25 : i32 to index
    %c0_10 = arith.constant 0 : index
    %27 = vector.load %arg2[%26, %c0_10] : memref<50x16xf32, #tpu.memory_space<vmem>>, vector<1x16xf32>
    %cst_11 = arith.constant 4.000000e+00 : f32
    %28 = vector.broadcast %cst_11 : f32 to vector<1x16xf32>
    %29 = arith.mulf %27, %28 : vector<1x16xf32>
    %c2 = arith.constant 2 : index
    %c0_12 = arith.constant 0 : index
    %30 = vector.load %arg3[%c2, %c0_12] : memref<16x16xf32, #tpu.memory_space<vmem>>, vector<1x16xf32>
    tpu.vector_store %arg3[%c2, %c0_12], %29 {strides = array<i32>} : memref<16x16xf32, #tpu.memory_space<vmem>>, vector<1x16xf32>,
    %c3_i32 = arith.constant 3 : i32
    %31 = arith.addi %0, %c3_i32 : i32
    %32 = arith.index_cast %31 : i32 to index
    %33 = memref.load %arg1[%32] : memref<16xi32, #tpu.memory_space<smem>>
    %c0_i32_13 = arith.constant 0 : i32
    %c49_i32_14 = arith.constant 49 : i32
    %34 = arith.maxsi %c0_i32_13, %33 : i32
    %35 = arith.minsi %c49_i32_14, %34 : i32
    %36 = arith.index_cast %35 : i32 to index
    %c0_15 = arith.constant 0 : index
    %37 = vector.load %arg2[%36, %c0_15] : memref<50x16xf32, #tpu.memory_space<vmem>>, vector<1x16xf32>
    %cst_16 = arith.constant 4.000000e+00 : f32
    %38 = vector.broadcast %cst_16 : f32 to vector<1x16xf32>
    %39 = arith.mulf %37, %38 : vector<1x16xf32>
    %c3 = arith.constant 3 : index
    %c0_17 = arith.constant 0 : index
    %40 = vector.load %arg3[%c3, %c0_17] : memref<16x16xf32, #tpu.memory_space<vmem>>, vector<1x16xf32>
    tpu.vector_store %arg3[%c3, %c0_17], %39 {strides = array<i32>} : memref<16x16xf32, #tpu.memory_space<vmem>>, vector<1x16xf32>,
    %c4_i32 = arith.constant 4 : i32
    %41 = arith.addi %0, %c4_i32 : i32
    %42 = arith.index_cast %41 : i32 to index
    %43 = memref.load %arg1[%42] : memref<16xi32, #tpu.memory_space<smem>>
    %c0_i32_18 = arith.constant 0 : i32
    %c49_i32_19 = arith.constant 49 : i32
    %44 = arith.maxsi %c0_i32_18, %43 : i32
    %45 = arith.minsi %c49_i32_19, %44 : i32
    %46 = arith.index_cast %45 : i32 to index
    %c0_20 = arith.constant 0 : index
    %47 = vector.load %arg2[%46, %c0_20] : memref<50x16xf32, #tpu.memory_space<vmem>>, vector<1x16xf32>
    %cst_21 = arith.constant 4.000000e+00 : f32
    %48 = vector.broadcast %cst_21 : f32 to vector<1x16xf32>
    %49 = arith.mulf %47, %48 : vector<1x16xf32>
    %c4 = arith.constant 4 : index
    %c0_22 = arith.constant 0 : index
    %50 = vector.load %arg3[%c4, %c0_22] : memref<16x16xf32, #tpu.memory_space<vmem>>, vector<1x16xf32>
    tpu.vector_store %arg3[%c4, %c0_22], %49 {strides = array<i32>} : memref<16x16xf32, #tpu.memory_space<vmem>>, vector<1x16xf32>,
    %c5_i32 = arith.constant 5 : i32
    %51 = arith.addi %0, %c5_i32 : i32
    %52 = arith.index_cast %51 : i32 to index
    %53 = memref.load %arg1[%52] : memref<16xi32, #tpu.memory_space<smem>>
    %c0_i32_23 = arith.constant 0 : i32
    %c49_i32_24 = arith.constant 49 : i32
    %54 = arith.maxsi %c0_i32_23, %53 : i32
    %55 = arith.minsi %c49_i32_24, %54 : i32
    %56 = arith.index_cast %55 : i32 to index
    %c0_25 = arith.constant 0 : index
    %57 = vector.load %arg2[%56, %c0_25] : memref<50x16xf32, #tpu.memory_space<vmem>>, vector<1x16xf32>
    %cst_26 = arith.constant 4.000000e+00 : f32
    %58 = vector.broadcast %cst_26 : f32 to vector<1x16xf32>
    %59 = arith.mulf %57, %58 : vector<1x16xf32>
    %c5 = arith.constant 5 : index
    %c0_27 = arith.constant 0 : index
    %60 = vector.load %arg3[%c5, %c0_27] : memref<16x16xf32, #tpu.memory_space<vmem>>, vector<1x16xf32>
    tpu.vector_store %arg3[%c5, %c0_27], %59 {strides = array<i32>} : memref<16x16xf32, #tpu.memory_space<vmem>>, vector<1x16xf32>,
    %c6_i32 = arith.constant 6 : i32
    %61 = arith.addi %0, %c6_i32 : i32
    %62 = arith.index_cast %61 : i32 to index
    %63 = memref.load %arg1[%62] : memref<16xi32, #tpu.memory_space<smem>>
    %c0_i32_28 = arith.constant 0 : i32
    %c49_i32_29 = arith.constant 49 : i32
    %64 = arith.maxsi %c0_i32_28, %63 : i32
    %65 = arith.minsi %c49_i32_29, %64 : i32
    %66 = arith.index_cast %65 : i32 to index
    %c0_30 = arith.constant 0 : index
    %67 = vector.load %arg2[%66, %c0_30] : memref<50x16xf32, #tpu.memory_space<vmem>>, vector<1x16xf32>
    %cst_31 = arith.constant 4.000000e+00 : f32
    %68 = vector.broadcast %cst_31 : f32 to vector<1x16xf32>
    %69 = arith.mulf %67, %68 : vector<1x16xf32>
    %c6 = arith.constant 6 : index
    %c0_32 = arith.constant 0 : index
    %70 = vector.load %arg3[%c6, %c0_32] : memref<16x16xf32, #tpu.memory_space<vmem>>, vector<1x16xf32>
    tpu.vector_store %arg3[%c6, %c0_32], %69 {strides = array<i32>} : memref<16x16xf32, #tpu.memory_space<vmem>>, vector<1x16xf32>,
    %c7_i32 = arith.constant 7 : i32
    %71 = arith.addi %0, %c7_i32 : i32
    %72 = arith.index_cast %71 : i32 to index
    %73 = memref.load %arg1[%72] : memref<16xi32, #tpu.memory_space<smem>>
    %c0_i32_33 = arith.constant 0 : i32
    %c49_i32_34 = arith.constant 49 : i32
    %74 = arith.maxsi %c0_i32_33, %73 : i32
    %75 = arith.minsi %c49_i32_34, %74 : i32
    %76 = arith.index_cast %75 : i32 to index
    %c0_35 = arith.constant 0 : index
    %77 = vector.load %arg2[%76, %c0_35] : memref<50x16xf32, #tpu.memory_space<vmem>>, vector<1x16xf32>
    %cst_36 = arith.constant 4.000000e+00 : f32
    %78 = vector.broadcast %cst_36 : f32 to vector<1x16xf32>
    %79 = arith.mulf %77, %78 : vector<1x16xf32>
    %c7 = arith.constant 7 : index
    %c0_37 = arith.constant 0 : index
    %80 = vector.load %arg3[%c7, %c0_37] : memref<16x16xf32, #tpu.memory_space<vmem>>, vector<1x16xf32>
    tpu.vector_store %arg3[%c7, %c0_37], %79 {strides = array<i32>} : memref<16x16xf32, #tpu.memory_space<vmem>>, vector<1x16xf32>,
    %c8_i32 = arith.constant 8 : i32
    %81 = arith.addi %0, %c8_i32 : i32
    %82 = arith.index_cast %81 : i32 to index
    %83 = memref.load %arg1[%82] : memref<16xi32, #tpu.memory_space<smem>>
    %c0_i32_38 = arith.constant 0 : i32
    %c49_i32_39 = arith.constant 49 : i32
    %84 = arith.maxsi %c0_i32_38, %83 : i32
    %85 = arith.minsi %c49_i32_39, %84 : i32
    %86 = arith.index_cast %85 : i32 to index
    %c0_40 = arith.constant 0 : index
    %87 = vector.load %arg2[%86, %c0_40] : memref<50x16xf32, #tpu.memory_space<vmem>>, vector<1x16xf32>
    %cst_41 = arith.constant 4.000000e+00 : f32
    %88 = vector.broadcast %cst_41 : f32 to vector<1x16xf32>
    %89 = arith.mulf %87, %88 : vector<1x16xf32>
    %c8 = arith.constant 8 : index
    %c0_42 = arith.constant 0 : index
    %90 = vector.load %arg3[%c8, %c0_42] : memref<16x16xf32, #tpu.memory_space<vmem>>, vector<1x16xf32>
    tpu.vector_store %arg3[%c8, %c0_42], %89 {strides = array<i32>} : memref<16x16xf32, #tpu.memory_space<vmem>>, vector<1x16xf32>,
    %c9_i32 = arith.constant 9 : i32
    %91 = arith.addi %0, %c9_i32 : i32
    %92 = arith.index_cast %91 : i32 to index
    %93 = memref.load %arg1[%92] : memref<16xi32, #tpu.memory_space<smem>>
    %c0_i32_43 = arith.constant 0 : i32
    %c49_i32_44 = arith.constant 49 : i32
    %94 = arith.maxsi %c0_i32_43, %93 : i32
    %95 = arith.minsi %c49_i32_44, %94 : i32
    %96 = arith.index_cast %95 : i32 to index
    %c0_45 = arith.constant 0 : index
    %97 = vector.load %arg2[%96, %c0_45] : memref<50x16xf32, #tpu.memory_space<vmem>>, vector<1x16xf32>
    %cst_46 = arith.constant 4.000000e+00 : f32
    %98 = vector.broadcast %cst_46 : f32 to vector<1x16xf32>
    %99 = arith.mulf %97, %98 : vector<1x16xf32>
    %c9 = arith.constant 9 : index
    %c0_47 = arith.constant 0 : index
    %100 = vector.load %arg3[%c9, %c0_47] : memref<16x16xf32, #tpu.memory_space<vmem>>, vector<1x16xf32>
    tpu.vector_store %arg3[%c9, %c0_47], %99 {strides = array<i32>} : memref<16x16xf32, #tpu.memory_space<vmem>>, vector<1x16xf32>,
    %c10_i32 = arith.constant 10 : i32
    %101 = arith.addi %0, %c10_i32 : i32
    %102 = arith.index_cast %101 : i32 to index
    %103 = memref.load %arg1[%102] : memref<16xi32, #tpu.memory_space<smem>>
    %c0_i32_48 = arith.constant 0 : i32
    %c49_i32_49 = arith.constant 49 : i32
    %104 = arith.maxsi %c0_i32_48, %103 : i32
    %105 = arith.minsi %c49_i32_49, %104 : i32
    %106 = arith.index_cast %105 : i32 to index
    %c0_50 = arith.constant 0 : index
    %107 = vector.load %arg2[%106, %c0_50] : memref<50x16xf32, #tpu.memory_space<vmem>>, vector<1x16xf32>
    %cst_51 = arith.constant 4.000000e+00 : f32
    %108 = vector.broadcast %cst_51 : f32 to vector<1x16xf32>
    %109 = arith.mulf %107, %108 : vector<1x16xf32>
    %c10 = arith.constant 10 : index
    %c0_52 = arith.constant 0 : index
    %110 = vector.load %arg3[%c10, %c0_52] : memref<16x16xf32, #tpu.memory_space<vmem>>, vector<1x16xf32>
    tpu.vector_store %arg3[%c10, %c0_52], %109 {strides = array<i32>} : memref<16x16xf32, #tpu.memory_space<vmem>>, vector<1x16xf32>,
    %c11_i32 = arith.constant 11 : i32
    %111 = arith.addi %0, %c11_i32 : i32
    %112 = arith.index_cast %111 : i32 to index
    %113 = memref.load %arg1[%112] : memref<16xi32, #tpu.memory_space<smem>>
    %c0_i32_53 = arith.constant 0 : i32
    %c49_i32_54 = arith.constant 49 : i32
    %114 = arith.maxsi %c0_i32_53, %113 : i32
    %115 = arith.minsi %c49_i32_54, %114 : i32
    %116 = arith.index_cast %115 : i32 to index
    %c0_55 = arith.constant 0 : index
    %117 = vector.load %arg2[%116, %c0_55] : memref<50x16xf32, #tpu.memory_space<vmem>>, vector<1x16xf32>
    %cst_56 = arith.constant 4.000000e+00 : f32
    %118 = vector.broadcast %cst_56 : f32 to vector<1x16xf32>
    %119 = arith.mulf %117, %118 : vector<1x16xf32>
    %c11 = arith.constant 11 : index
    %c0_57 = arith.constant 0 : index
    %120 = vector.load %arg3[%c11, %c0_57] : memref<16x16xf32, #tpu.memory_space<vmem>>, vector<1x16xf32>
    tpu.vector_store %arg3[%c11, %c0_57], %119 {strides = array<i32>} : memref<16x16xf32, #tpu.memory_space<vmem>>, vector<1x16xf32>,
    %c12_i32 = arith.constant 12 : i32
    %121 = arith.addi %0, %c12_i32 : i32
    %122 = arith.index_cast %121 : i32 to index
    %123 = memref.load %arg1[%122] : memref<16xi32, #tpu.memory_space<smem>>
    %c0_i32_58 = arith.constant 0 : i32
    %c49_i32_59 = arith.constant 49 : i32
    %124 = arith.maxsi %c0_i32_58, %123 : i32
    %125 = arith.minsi %c49_i32_59, %124 : i32
    %126 = arith.index_cast %125 : i32 to index
    %c0_60 = arith.constant 0 : index
    %127 = vector.load %arg2[%126, %c0_60] : memref<50x16xf32, #tpu.memory_space<vmem>>, vector<1x16xf32>
    %cst_61 = arith.constant 4.000000e+00 : f32
    %128 = vector.broadcast %cst_61 : f32 to vector<1x16xf32>
    %129 = arith.mulf %127, %128 : vector<1x16xf32>
    %c12 = arith.constant 12 : index
    %c0_62 = arith.constant 0 : index
    %130 = vector.load %arg3[%c12, %c0_62] : memref<16x16xf32, #tpu.memory_space<vmem>>, vector<1x16xf32>
    tpu.vector_store %arg3[%c12, %c0_62], %129 {strides = array<i32>} : memref<16x16xf32, #tpu.memory_space<vmem>>, vector<1x16xf32>,
    %c13_i32 = arith.constant 13 : i32
    %131 = arith.addi %0, %c13_i32 : i32
    %132 = arith.index_cast %131 : i32 to index
    %133 = memref.load %arg1[%132] : memref<16xi32, #tpu.memory_space<smem>>
    %c0_i32_63 = arith.constant 0 : i32
    %c49_i32_64 = arith.constant 49 : i32
    %134 = arith.maxsi %c0_i32_63, %133 : i32
    %135 = arith.minsi %c49_i32_64, %134 : i32
    %136 = arith.index_cast %135 : i32 to index
    %c0_65 = arith.constant 0 : index
    %137 = vector.load %arg2[%136, %c0_65] : memref<50x16xf32, #tpu.memory_space<vmem>>, vector<1x16xf32>
    %cst_66 = arith.constant 4.000000e+00 : f32
    %138 = vector.broadcast %cst_66 : f32 to vector<1x16xf32>
    %139 = arith.mulf %137, %138 : vector<1x16xf32>
    %c13 = arith.constant 13 : index
    %c0_67 = arith.constant 0 : index
    %140 = vector.load %arg3[%c13, %c0_67] : memref<16x16xf32, #tpu.memory_space<vmem>>, vector<1x16xf32>
    tpu.vector_store %arg3[%c13, %c0_67], %139 {strides = array<i32>} : memref<16x16xf32, #tpu.memory_space<vmem>>, vector<1x16xf32>,
    %c14_i32 = arith.constant 14 : i32
    %141 = arith.addi %0, %c14_i32 : i32
    %142 = arith.index_cast %141 : i32 to index
    %143 = memref.load %arg1[%142] : memref<16xi32, #tpu.memory_space<smem>>
    %c0_i32_68 = arith.constant 0 : i32
    %c49_i32_69 = arith.constant 49 : i32
    %144 = arith.maxsi %c0_i32_68, %143 : i32
    %145 = arith.minsi %c49_i32_69, %144 : i32
    %146 = arith.index_cast %145 : i32 to index
    %c0_70 = arith.constant 0 : index
    %147 = vector.load %arg2[%146, %c0_70] : memref<50x16xf32, #tpu.memory_space<vmem>>, vector<1x16xf32>
    %cst_71 = arith.constant 4.000000e+00 : f32
    %148 = vector.broadcast %cst_71 : f32 to vector<1x16xf32>
    %149 = arith.mulf %147, %148 : vector<1x16xf32>
    %c14 = arith.constant 14 : index
    %c0_72 = arith.constant 0 : index
    %150 = vector.load %arg3[%c14, %c0_72] : memref<16x16xf32, #tpu.memory_space<vmem>>, vector<1x16xf32>
    tpu.vector_store %arg3[%c14, %c0_72], %149 {strides = array<i32>} : memref<16x16xf32, #tpu.memory_space<vmem>>, vector<1x16xf32>,
    %c15_i32 = arith.constant 15 : i32
    %151 = arith.addi %0, %c15_i32 : i32
    %152 = arith.index_cast %151 : i32 to index
    %153 = memref.load %arg1[%152] : memref<16xi32, #tpu.memory_space<smem>>
    %c0_i32_73 = arith.constant 0 : i32
    %c49_i32_74 = arith.constant 49 : i32
    %154 = arith.maxsi %c0_i32_73, %153 : i32
    %155 = arith.minsi %c49_i32_74, %154 : i32
    %156 = arith.index_cast %155 : i32 to index
    %c0_75 = arith.constant 0 : index
    %157 = vector.load %arg2[%156, %c0_75] : memref<50x16xf32, #tpu.memory_space<vmem>>, vector<1x16xf32>
    %cst_76 = arith.constant 4.000000e+00 : f32
    %158 = vector.broadcast %cst_76 : f32 to vector<1x16xf32>
    %159 = arith.mulf %157, %158 : vector<1x16xf32>
    %c15 = arith.constant 15 : index
    %c0_77 = arith.constant 0 : index
    %160 = vector.load %arg3[%c15, %c0_77] : memref<16x16xf32, #tpu.memory_space<vmem>>, vector<1x16xf32>
    tpu.vector_store %arg3[%c15, %c0_77], %159 {strides = array<i32>} : memref<16x16xf32, #tpu.memory_space<vmem>>, vector<1x16xf32>,
    return
  }
  func.func @transform_0(%arg0: i32, %arg1: memref<16xi32, #tpu.memory_space<smem>>) -> (i32, i32) {
    %c0_i32 = arith.constant 0 : i32
    %c0_i32_0 = arith.constant 0 : i32
    %c0_i32_1 = arith.constant 0 : i32
    return %c0_i32, %c0_i32_0 : i32, i32
  }
  func.func @transform_1(%arg0: i32, %arg1: memref<16xi32, #tpu.memory_space<smem>>) -> (i32, i32) {
    %c0_i32 = arith.constant 0 : i32
    %c0_i32_0 = arith.constant 0 : i32
    return %arg0, %c0_i32 : i32, i32
  }
}

</mosaic_0001>

<llo_original>
// kernel: tpu_custom_call.1
$region0: #{tpu_custom_call.1}
  #allocation0 [shape = 'u32[]', space=smem, size = 0x4, offset = 0x4, fixed_abs, tag = 'smem constant byte address 0x4 - core index']
  #allocation1 [shape = 'u32[144,128]{1,0:T(1,128)}', space=vmem, size = 0x12000, scoped, tag = 'internal scratch']
  #allocation2 [shape = 's32[1]{0}', space=sflag, size = 0x4, scoped, tag = 'scoped memory for tpu_custom_call.1']
  #allocation3 [shape = 'u8[512]{0}', space=smem, size = 0x200, scoped, tag = 'prefetched SMEM operand 0']
  %s0 = inlined_call_operand.vmem [shape: s32[16], index: 0, kind: input, shape index: {}]
  %s1 = inlined_call_operand.vmem [shape: f32[50,16], index: 1, kind: input, shape index: {}]
  %s2 = inlined_call_operand.hbm [shape: f32[16,16], index: 2, kind: output, shape index: {}]
  %s3 = sld [smem:[#allocation0]]
  $region14: #{tpu_custom_call.1} parent=0
    _
  %s5 = ssub.s32 1, %s3
  %s6 = scalar_select 0, %s5, %s3
  %s7 = sshll.u32 %s0, 4
  %s8 = int_to_ptr.vmem [resolvable:$true] %s7
  %10 = dma.vmem_to_smem %s8, 16, [#allocation3], [#allocation2]
  %11 = dma.done [#allocation2], 16
  %12 = sfence
  $region1: #{tpu_custom_call.1} parent=0
    #allocation4 [shape = 'u8[8192]{0}', space=vmem, size = 0x2000, scoped, tag = 'output window, operand 0, single buffered']
    #allocation5 [shape = 's32[1]{0}', space=sflag, size = 0x4, scoped, tag = 'scoped memory for tpu_custom_call.1']
    %13 = vsyncpa [#allocation5], 0
    // Predicated region
    $region2: #{tpu_custom_call.1} parent=1 // pred_check
      _
    $region3: #{tpu_custom_call.1} parent=1 // pred_check_branch
      %15 = sbr.rel (0) target = $region5
    $region4: #{tpu_custom_call.1} parent=1 // pred_region
      _
    $region5: #{tpu_custom_call.1} parent=1 // pred_fallthru
      _
    %s16 = smul.u32 0, 16
    %s17 = sld [smem:[#allocation3 + %s16]]
    %p18 = scmp.gt.s32.totalorder %s17, 0
    %s19 = scalar_select %p18, %s17, 0
    %p20 = scmp.lt.s32.totalorder %s19, 49
    %s21 = scalar_select %p20, %s19, 49
    %s22 = scalar_lea.vmem %s1, %s21
    %v23 = vld [vmem:[%s22] sm:$0x1]
    %v24 = vmul.f32 %v23, 4.0
    %vm25 = vcmask 122880
    %26 = vst.msk [vmem:[#allocation4] sm:$0x1] %vm25, %v24
    %s27 = sadd.s32 %s16, 1
    %s28 = sld [smem:[#allocation3 + %s27]]
    %p29 = scmp.gt.s32.totalorder %s28, 0
    %s30 = scalar_select %p29, %s28, 0
    %p31 = scmp.lt.s32.totalorder %s30, 49
    %s32 = scalar_select %p31, %s30, 49
    %s33 = scalar_lea.vmem %s1, %s32
    %v34 = vld [vmem:[%s33] sm:$0x1]
    %v35 = vmul.f32 %v34, 4.0
    %36 = vst.msk [vmem:[#allocation4 + $0x1] sm:$0x1] %vm25, %v35
    %s37 = sadd.s32 %s16, 2
    %s38 = sld [smem:[#allocation3 + %s37]]
    %p39 = scmp.gt.s32.totalorder %s38, 0
    %s40 = scalar_select %p39, %s38, 0
    %p41 = scmp.lt.s32.totalorder %s40, 49
    %s42 = scalar_select %p41, %s40, 49
    %s43 = scalar_lea.vmem %s1, %s42
    %v44 = vld [vmem:[%s43] sm:$0x1]
    %v45 = vmul.f32 %v44, 4.0
    %46 = vst.msk [vmem:[#allocation4 + $0x2] sm:$0x1] %vm25, %v45
    %s47 = sadd.s32 %s16, 3
    %s48 = sld [smem:[#allocation3 + %s47]]
    %p49 = scmp.gt.s32.totalorder %s48, 0
    %s50 = scalar_select %p49, %s48, 0
    %p51 = scmp.lt.s32.totalorder %s50, 49
    %s52 = scalar_select %p51, %s50, 49
    %s53 = scalar_lea.vmem %s1, %s52
    %v54 = vld [vmem:[%s53] sm:$0x1]
    %v55 = vmul.f32 %v54, 4.0
    %56 = vst.msk [vmem:[#allocation4 + $0x3] sm:$0x1] %vm25, %v55
    %s57 = sadd.s32 %s16, 4
    %s58 = sld [smem:[#allocation3 + %s57]]
    %p59 = scmp.gt.s32.totalorder %s58, 0
    %s60 = scalar_select %p59, %s58, 0
    %p61 = scmp.lt.s32.totalorder %s60, 49
    %s62 = scalar_select %p61, %s60, 49
    %s63 = scalar_lea.vmem %s1, %s62
    %v64 = vld [vmem:[%s63] sm:$0x1]
    %v65 = vmul.f32 %v64, 4.0
    %66 = vst.msk [vmem:[#allocation4 + $0x4] sm:$0x1] %vm25, %v65
    %s67 = sadd.s32 %s16, 5
    %s68 = sld [smem:[#allocation3 + %s67]]
    %p69 = scmp.gt.s32.totalorder %s68, 0
    %s70 = scalar_select %p69, %s68, 0
    %p71 = scmp.lt.s32.totalorder %s70, 49
    %s72 = scalar_select %p71, %s70, 49
    %s73 = scalar_lea.vmem %s1, %s72
    %v74 = vld [vmem:[%s73] sm:$0x1]
    %v75 = vmul.f32 %v74, 4.0
    %76 = vst.msk [vmem:[#allocation4 + $0x5] sm:$0x1] %vm25, %v75
    %s77 = sadd.s32 %s16, 6
    %s78 = sld [smem:[#allocation3 + %s77]]
    %p79 = scmp.gt.s32.totalorder %s78, 0
    %s80 = scalar_select %p79, %s78, 0
    %p81 = scmp.lt.s32.totalorder %s80, 49
    %s82 = scalar_select %p81, %s80, 49
    %s83 = scalar_lea.vmem %s1, %s82
    %v84 = vld [vmem:[%s83] sm:$0x1]
    %v85 = vmul.f32 %v84, 4.0
    %86 = vst.msk [vmem:[#allocation4 + $0x6] sm:$0x1] %vm25, %v85
    %s87 = sadd.s32 %s16, 7
    %s88 = sld [smem:[#allocation3 + %s87]]
    %p89 = scmp.gt.s32.totalorder %s88, 0
    %s90 = scalar_select %p89, %s88, 0
    %p91 = scmp.lt.s32.totalorder %s90, 49
    %s92 = scalar_select %p91, %s90, 49
    %s93 = scalar_lea.vmem %s1, %s92
    %v94 = vld [vmem:[%s93] sm:$0x1]
    %v95 = vmul.f32 %v94, 4.0
    %96 = vst.msk [vmem:[#allocation4 + $0x7] sm:$0x1] %vm25, %v95
    %s97 = sadd.s32 %s16, 8
    %s98 = sld [smem:[#allocation3 + %s97]]
    %p99 = scmp.gt.s32.totalorder %s98, 0
    %s100 = scalar_select %p99, %s98, 0
    %p101 = scmp.lt.s32.totalorder %s100, 49
    %s102 = scalar_select %p101, %s100, 49
    %s103 = scalar_lea.vmem %s1, %s102
    %v104 = vld [vmem:[%s103] sm:$0x1]
    %v105 = vmul.f32 %v104, 4.0
    %106 = vst.msk [vmem:[#allocation4 + $0x8] sm:$0x1] %vm25, %v105
    %s107 = sadd.s32 %s16, 9
    %s108 = sld [smem:[#allocation3 + %s107]]
    %p109 = scmp.gt.s32.totalorder %s108, 0
    %s110 = scalar_select %p109, %s108, 0
    %p111 = scmp.lt.s32.totalorder %s110, 49
    %s112 = scalar_select %p111, %s110, 49
    %s113 = scalar_lea.vmem %s1, %s112
    %v114 = vld [vmem:[%s113] sm:$0x1]
    %v115 = vmul.f32 %v114, 4.0
    %116 = vst.msk [vmem:[#allocation4 + $0x9] sm:$0x1] %vm25, %v115
    %s117 = sadd.s32 %s16, 10
    %s118 = sld [smem:[#allocation3 + %s117]]
    %p119 = scmp.gt.s32.totalorder %s118, 0
    %s120 = scalar_select %p119, %s118, 0
    %p121 = scmp.lt.s32.totalorder %s120, 49
    %s122 = scalar_select %p121, %s120, 49
    %s123 = scalar_lea.vmem %s1, %s122
    %v124 = vld [vmem:[%s123] sm:$0x1]
    %v125 = vmul.f32 %v124, 4.0
    %126 = vst.msk [vmem:[#allocation4 + $0xa] sm:$0x1] %vm25, %v125
    %s127 = sadd.s32 %s16, 11
    %s128 = sld [smem:[#allocation3 + %s127]]
    %p129 = scmp.gt.s32.totalorder %s128, 0
    %s130 = scalar_select %p129, %s128, 0
    %p131 = scmp.lt.s32.totalorder %s130, 49
    %s132 = scalar_select %p131, %s130, 49
    %s133 = scalar_lea.vmem %s1, %s132
    %v134 = vld [vmem:[%s133] sm:$0x1]
    %v135 = vmul.f32 %v134, 4.0
    %136 = vst.msk [vmem:[#allocation4 + $0xb] sm:$0x1] %vm25, %v135
    %s137 = sadd.s32 %s16, 12
    %s138 = sld [smem:[#allocation3 + %s137]]
    %p139 = scmp.gt.s32.totalorder %s138, 0
    %s140 = scalar_select %p139, %s138, 0
    %p141 = scmp.lt.s32.totalorder %s140, 49
    %s142 = scalar_select %p141, %s140, 49
    %s143 = scalar_lea.vmem %s1, %s142
    %v144 = vld [vmem:[%s143] sm:$0x1]
    %v145 = vmul.f32 %v144, 4.0
    %146 = vst.msk [vmem:[#allocation4 + $0xc] sm:$0x1] %vm25, %v145
    %s147 = sadd.s32 %s16, 13
    %s148 = sld [smem:[#allocation3 + %s147]]
    %p149 = scmp.gt.s32.totalorder %s148, 0
    %s150 = scalar_select %p149, %s148, 0
    %p151 = scmp.lt.s32.totalorder %s150, 49
    %s152 = scalar_select %p151, %s150, 49
    %s153 = scalar_lea.vmem %s1, %s152
    %v154 = vld [vmem:[%s153] sm:$0x1]
    %v155 = vmul.f32 %v154, 4.0
    %156 = vst.msk [vmem:[#allocation4 + $0xd] sm:$0x1] %vm25, %v155
    %s157 = sadd.s32 %s16, 14
    %s158 = sld [smem:[#allocation3 + %s157]]
    %p159 = scmp.gt.s32.totalorder %s158, 0
    %s160 = scalar_select %p159, %s158, 0
    %p161 = scmp.lt.s32.totalorder %s160, 49
    %s162 = scalar_select %p161, %s160, 49
    %s163 = scalar_lea.vmem %s1, %s162
    %v164 = vld [vmem:[%s163] sm:$0x1]
    %v165 = vmul.f32 %v164, 4.0
    %166 = vst.msk [vmem:[#allocation4 + $0xe] sm:$0x1] %vm25, %v165
    %s167 = sadd.s32 %s16, 15
    %s168 = sld [smem:[#allocation3 + %s167]]
    %p169 = scmp.gt.s32.totalorder %s168, 0
    %s170 = scalar_select %p169, %s168, 0
    %p171 = scmp.lt.s32.totalorder %s170, 49
    %s172 = scalar_select %p171, %s170, 49
    %s173 = scalar_lea.vmem %s1, %s172
    %v174 = vld [vmem:[%s173] sm:$0x1]
    %v175 = vmul.f32 %v174, 4.0
    %176 = vst.msk [vmem:[#allocation4 + $0xf] sm:$0x1] %vm25, %v175
    // Predicated region
    $region6: #{tpu_custom_call.1} parent=1 // pred_check
      _
    $region7: #{tpu_custom_call.1} parent=1 // pred_check_branch
      %178 = sbr.rel (0) target = $region9
    $region8: #{tpu_custom_call.1} parent=1 // pred_region
      %s180 = ssub.s32 256, 256
      %181 = vsyncadd [#allocation5], %s180
      %s182 = sshll.u32 [#allocation4], 4
      %s183 = int_to_ptr.vmem [resolvable:$true] %s182
      %188 = dma.vmem_to_hbm [thread:$0]  %s183, 256, %s2, [#allocation5], 128, 128, 8
    $region9: #{tpu_custom_call.1} parent=1 // pred_fallthru
      _
    // Predicated region
    $region10: #{tpu_custom_call.1} parent=1 // pred_check
      _
    $region11: #{tpu_custom_call.1} parent=1 // pred_check_branch
      %190 = sbr.rel (0) target = $region13
    $region12: #{tpu_custom_call.1} parent=1 // pred_region
      %191 = dma.done [#allocation5], 256
    $region13: #{tpu_custom_call.1} parent=1 // pred_fallthru
      _
    %192 = vsyncpa [#allocation5], 1

</llo_original>
